<compile_context>
chip_gen: v7x
topology: tpu7x:2x2x1
jax: 0.10.0
libtpu: 0.0.40
codegen_flags: <defaults>
</compile_context>

<pallas_src>
from functools import partial

import numpy as np
import jax
import jax.numpy as jnp
from jax.experimental import pallas as pl
from jax.experimental.pallas import tpu as pltpu  # noqa: F401  (TPU backend extensions)


# ---------------------------------------------------------------------------
# Helpers
# ---------------------------------------------------------------------------
def _round_up(x, m):
    return ((x + m - 1) // m) * m


def _is_pow2(x):
    return x > 0 and (x & (x - 1)) == 0


def build_grid_nchw(resolution):
    """Original PyTorch-style grid [1, 4, H, W] (y, x, 1-y, 1-x) -- reference check only."""
    ranges = [np.linspace(0.0, 1.0, num=res) for res in resolution]
    grid = np.meshgrid(*ranges, sparse=False, indexing="ij")
    grid = np.stack(grid, axis=-1)
    grid = np.reshape(grid, [resolution[0], resolution[1], -1])
    grid = np.expand_dims(grid, axis=0).astype(np.float32)        # [1, H, W, 2]
    grid = np.concatenate([grid, 1.0 - grid], axis=-1)            # [1, H, W, 4]
    grid = np.transpose(grid, (0, 3, 1, 2))                       # [1, 4, H, W]
    return jnp.asarray(grid)


def _build_grid_yx_padded(resolution, hw_pad):
    """Fallback constant grid (2, hw_pad): rows = (y, x), lane-padded with zeros."""
    H, W = resolution
    ranges = [np.linspace(0.0, 1.0, num=r) for r in resolution]
    yy, xx = np.meshgrid(*ranges, sparse=False, indexing="ij")
    g = np.zeros((2, hw_pad), dtype=np.float32)
    g[0, : H * W] = yy.reshape(-1)
    g[1, : H * W] = xx.reshape(-1)
    return jnp.asarray(g)


# ---------------------------------------------------------------------------
# Pallas kernels
# ---------------------------------------------------------------------------
def _make_iota_kernel(H, W, hw_pad):
    """Grid generated in-kernel; requires W to be a power of two (shift/mask row/col)."""
    inv_y = np.float32(1.0 / (H - 1)) if H > 1 else np.float32(0.0)
    inv_x = np.float32(1.0 / (W - 1)) if W > 1 else np.float32(0.0)
    shift = W.bit_length() - 1          # log2(W)
    mask = W - 1

    def kernel(w_ref, b_ref, o_ref):
        # w_ref: (hidden_p, 4)   b_ref: (hidden_p, 1)   o_ref: (hidden_p, hw_pad)
        p = jax.lax.broadcasted_iota(jnp.int32, (1, hw_pad), 1)
        y = (p >> shift).astype(jnp.float32) * inv_y       # (1, hw_pad)
        x = (p & mask).astype(jnp.float32) * inv_x          # (1, hw_pad)

        w = w_ref[...]
        # In-kernel fold of the (y, x, 1-y, 1-x) channels and the bias:
        #   out = (w0-w2)*y + (w1-w3)*x + (b + w2 + w3)
        w_y = w[:, 0:1] - w[:, 2:3]
        w_x = w[:, 1:2] - w[:, 3:4]
        b_eff = b_ref[...] + w[:, 2:3] + w[:, 3:4]

        # Bias in the accumulator init + two broadcasted (outer-product) VPU FMAs.
        o_ref[...] = b_eff + w_y * y + w_x * x

    return kernel


def _grid_input_kernel(w_ref, b_ref, g_ref, o_ref):
    """Fallback for non-power-of-two W: constant (2, hw_pad) grid passed as an input."""
    w = w_ref[...]
    g = g_ref[...]
    w_y = w[:, 0:1] - w[:, 2:3]
    w_x = w[:, 1:2] - w[:, 3:4]
    b_eff = b_ref[...] + w[:, 2:3] + w[:, 3:4]
    o_ref[...] = b_eff + w_y * g[0:1, :] + w_x * g[1:2, :]


# ---------------------------------------------------------------------------
# Wrapper
# ---------------------------------------------------------------------------
@partial(jax.jit, static_argnames=("resolution",))
def soft_position_embed(weight, bias, resolution):
    """weight: [hidden, 4, 1, 1], bias: [hidden] -> [1, hidden, H, W] (NCHW).

    Matches PyTorch: Conv2d(4, hidden, 1, bias=True)(build_grid(resolution)).
    """
    H, W = resolution
    HW = H * W
    hidden = weight.shape[0]
    hw_pad = _round_up(HW, 128)          # lane-dense, unmasked stores
    hidden_pad = _round_up(hidden, 8)    # sublane alignment

    w2d = weight.reshape(hidden, 4).astype(jnp.float32)
    b2d = bias.reshape(hidden, 1).astype(jnp.float32)
    if hidden_pad != hidden:
        w2d = jnp.pad(w2d, ((0, hidden_pad - hidden), (0, 0)))
        b2d = jnp.pad(b2d, ((0, hidden_pad - hidden), (0, 0)))

    out_shape = jax.ShapeDtypeStruct((hidden_pad, hw_pad), jnp.float32)

    if _is_pow2(W):
        out_cm = pl.pallas_call(
            _make_iota_kernel(H, W, hw_pad),
            out_shape=out_shape,
            in_specs=[
                pl.BlockSpec((hidden_pad, 4), lambda: (0, 0)),
                pl.BlockSpec((hidden_pad, 1), lambda: (0, 0)),
            ],
            out_specs=pl.BlockSpec((hidden_pad, hw_pad), lambda: (0, 0)),
        )(w2d, b2d)
    else:
        # TODO(synk): non-power-of-two W keeps the compile-time-constant grid operand.
        grid_yx = _build_grid_yx_padded((H, W), hw_pad)
        out_cm = pl.pallas_call(
            _grid_input_kernel,
            out_shape=out_shape,
            in_specs=[
                pl.BlockSpec((hidden_pad, 4), lambda: (0, 0)),
                pl.BlockSpec((hidden_pad, 1), lambda: (0, 0)),
                pl.BlockSpec((2, hw_pad), lambda: (0, 0)),
            ],
            out_specs=pl.BlockSpec((hidden_pad, hw_pad), lambda: (0, 0)),
        )(w2d, b2d, grid_yx)

    if hidden_pad != hidden or hw_pad != HW:
        out_cm = out_cm[:hidden, :HW]
    # (hidden, HW) reshapes directly to NCHW -- no transpose needed.
    return out_cm.reshape(1, hidden, H, W)


# ---------------------------------------------------------------------------
# Demo / correctness check
# ---------------------------------------------------------------------------
if __name__ == "__main__":
    hidden_size = 32
    resolution = (16, 16)

    # Deterministic parameter init (Conv2d(4, hidden, 1, 1, 0, bias=True) shapes).
    key = jax.random.PRNGKey(0)
    kw, kb = jax.random.split(key)
    weight = jax.random.normal(kw, (hidden_size, 4, 1, 1), dtype=jnp.float32) * 0.1
    bias = jax.random.normal(kb, (hidden_size,), dtype=jnp.float32) * 0.1

    out = soft_position_embed(weight, bias, resolution)
    out = jax.block_until_ready(out)

    # Plain-JAX reference of the original 4-channel 1x1 conv over the build_grid grid.
    grid4 = build_grid_nchw(resolution)               # [1, 4, 16, 16]
    ref = (
        jnp.einsum("oc,chw->ohw", weight.reshape(hidden_size, 4), grid4[0])
        + bias[:, None, None]
    )[None]

    assert out.shape == (1, hidden_size, resolution[0], resolution[1])
    assert jnp.allclose(out, ref, atol=1e-5, rtol=1e-5)

    print("KERNEL_OK")
</pallas_src>

<mosaic_0001>
module attributes {stable_mosaic.version = 11 : i64} {
  func.func @kernel(%arg0: memref<32x4xf32, #tpu.memory_space<vmem>>, %arg1: memref<32x1xf32, #tpu.memory_space<vmem>>, %arg2: memref<32x256xf32, #tpu.memory_space<vmem>>) attributes {dimension_semantics = [], scalar_prefetch = 0 : i64, scratch_operands = 0 : i64, tpu.core_type = #tpu.core_type<tc>} {
    %0 = tpu.iota {dimensions = array<i32: 1>} : vector<1x256xi32>
    %c4_i32 = arith.constant 4 : i32
    %1 = vector.broadcast %c4_i32 : i32 to vector<1x256xi32>
    %2 = arith.shrsi %0, %1 : vector<1x256xi32>
    %3 = arith.sitofp %2 : vector<1x256xi32> to vector<1x256xf32>
    %cst = arith.constant 0.0666666701 : f32
    %4 = vector.broadcast %cst : f32 to vector<1x256xf32>
    %5 = arith.mulf %3, %4 : vector<1x256xf32>
    %c15_i32 = arith.constant 15 : i32
    %6 = vector.broadcast %c15_i32 : i32 to vector<1x256xi32>
    %7 = arith.andi %0, %6 : vector<1x256xi32>
    %8 = arith.sitofp %7 : vector<1x256xi32> to vector<1x256xf32>
    %cst_0 = arith.constant 0.0666666701 : f32
    %9 = vector.broadcast %cst_0 : f32 to vector<1x256xf32>
    %10 = arith.mulf %8, %9 : vector<1x256xf32>
    %c0 = arith.constant 0 : index
    %c0_1 = arith.constant 0 : index
    %11 = vector.load %arg0[%c0, %c0_1] : memref<32x4xf32, #tpu.memory_space<vmem>>, vector<32x4xf32>
    %12 = vector.extract_strided_slice %11 {offsets = [0, 0], sizes = [32, 1], strides = [1, 1]} : vector<32x4xf32> to vector<32x1xf32>
    %13 = vector.extract_strided_slice %11 {offsets = [0, 2], sizes = [32, 1], strides = [1, 1]} : vector<32x4xf32> to vector<32x1xf32>
    %14 = arith.subf %12, %13 : vector<32x1xf32>
    %15 = vector.extract_strided_slice %11 {offsets = [0, 1], sizes = [32, 1], strides = [1, 1]} : vector<32x4xf32> to vector<32x1xf32>
    %16 = vector.extract_strided_slice %11 {offsets = [0, 3], sizes = [32, 1], strides = [1, 1]} : vector<32x4xf32> to vector<32x1xf32>
    %17 = arith.subf %15, %16 : vector<32x1xf32>
    %c0_2 = arith.constant 0 : index
    %c0_3 = arith.constant 0 : index
    %18 = vector.load %arg1[%c0_2, %c0_3] : memref<32x1xf32, #tpu.memory_space<vmem>>, vector<32x1xf32>
    %19 = vector.extract_strided_slice %11 {offsets = [0, 2], sizes = [32, 1], strides = [1, 1]} : vector<32x4xf32> to vector<32x1xf32>
    %20 = arith.addf %18, %19 : vector<32x1xf32>
    %21 = vector.extract_strided_slice %11 {offsets = [0, 3], sizes = [32, 1], strides = [1, 1]} : vector<32x4xf32> to vector<32x1xf32>
    %22 = arith.addf %20, %21 : vector<32x1xf32>
    %23 = vector.broadcast %14 : vector<32x1xf32> to vector<32x256xf32>
    %24 = vector.broadcast %5 : vector<1x256xf32> to vector<32x256xf32>
    %25 = arith.mulf %23, %24 : vector<32x256xf32>
    %26 = vector.broadcast %22 : vector<32x1xf32> to vector<32x256xf32>
    %27 = arith.addf %26, %25 : vector<32x256xf32>
    %28 = vector.broadcast %17 : vector<32x1xf32> to vector<32x256xf32>
    %29 = vector.broadcast %10 : vector<1x256xf32> to vector<32x256xf32>
    %30 = arith.mulf %28, %29 : vector<32x256xf32>
    %31 = arith.addf %27, %30 : vector<32x256xf32>
    %c0_4 = arith.constant 0 : index
    %c0_5 = arith.constant 0 : index
    %32 = vector.load %arg2[%c0_4, %c0_5] : memref<32x256xf32, #tpu.memory_space<vmem>>, vector<32x256xf32>
    tpu.vector_store %arg2[%c0_4, %c0_5], %31 {strides = array<i32>} : memref<32x256xf32, #tpu.memory_space<vmem>>, vector<32x256xf32>,
    return
  }
}

</mosaic_0001>

<llo_original>
// kernel: soft_position_embed.1
$region0: #{soft_position_embed.1}
  #allocation0 [shape = 'u32[]', space=smem, size = 0x4, offset = 0x4, fixed_abs, tag = 'smem constant byte address 0x4 - core index']
  #allocation1 [shape = 'u32[144,128]{1,0:T(1,128)}', space=vmem, size = 0x12000, scoped, tag = 'internal scratch']
  %s0 = inlined_call_operand.vmem [shape: f32[32,4], index: 0, kind: input, shape index: {}]
  %s1 = inlined_call_operand.vmem [shape: f32[32,1], index: 1, kind: input, shape index: {}]
  %s2 = inlined_call_operand.vmem [shape: f32[32,256], index: 2, kind: output, shape index: {}]
  %s3 = sld [smem:[#allocation0]]
  $region18: #{soft_position_embed.1} parent=0
    _
  %s5 = ssub.s32 1, %s3
  %s6 = scalar_select 0, %s5, %s3
  // Predicated region
  $region2: #{soft_position_embed.1} parent=0 // pred_check
    _
  $region3: #{soft_position_embed.1} parent=0 // pred_check_branch
    %8 = sbr.rel (0) target = $region5
  $region4: #{soft_position_embed.1} parent=0 // pred_region
    _
  $region5: #{soft_position_embed.1} parent=0 // pred_fallthru
    _
  // Predicated region
  $region6: #{soft_position_embed.1} parent=0 // pred_check
    _
  $region7: #{soft_position_embed.1} parent=0 // pred_check_branch
    %10 = sbr.rel (0) target = $region9
  $region8: #{soft_position_embed.1} parent=0 // pred_region
    _
  $region9: #{soft_position_embed.1} parent=0 // pred_fallthru
    _
  %v11 = vlaneseq
  %v12 = vand.u32 %v11, 127
  %v13 = vadd.s32 %v12, 128
  %v14 = vshra.s32 %v12, 4
  %v15 = vshra.s32 %v13, 4
  %v16 = vcvt.s32.f32 %v14
  %v17 = vcvt.s32.f32 %v15
  %v18 = vmul.f32 %v16, 0.06666667
  %v19 = vmul.f32 %v17, 0.06666667
  %v20 = vand.u32 %v12, 15
  %v21 = vand.u32 %v13, 15
  %v22 = vcvt.s32.f32 %v20
  %v23 = vcvt.s32.f32 %v21
  %v24 = vmul.f32 %v22, 0.06666667
  %v25 = vmul.f32 %v23, 0.06666667
  %v26 = vld [vmem:[%s0] sm:$0xff]
  %v27 = vld [vmem:[%s0 + $0x8] sm:$0xff]
  %v28 = vld [vmem:[%s0 + $0x10] sm:$0xff]
  %v29 = vld [vmem:[%s0 + $0x18] sm:$0xff]
  %34 = vrot.lane.b32.xlu0 %v26, 126
  %v35 = vpop.permute.xlu0 %34
  %36 = vrot.lane.b32.xlu0 %v27, 126
  %v37 = vpop.permute.xlu0 %36
  %38 = vrot.lane.b32.xlu0 %v28, 126
  %v39 = vpop.permute.xlu0 %38
  %40 = vrot.lane.b32.xlu0 %v29, 126
  %v41 = vpop.permute.xlu0 %40
  %v46 = vsub.f32 %v26, %v35
  %v47 = vsub.f32 %v27, %v37
  %v48 = vsub.f32 %v28, %v39
  %v49 = vsub.f32 %v29, %v41
  %v50 = vld [vmem:[%s1] sm:$0xff]
  %v51 = vld [vmem:[%s1 + $0x8] sm:$0xff]
  %v52 = vld [vmem:[%s1 + $0x10] sm:$0xff]
  %v53 = vld [vmem:[%s1 + $0x18] sm:$0xff]
  %v54 = vadd.f32 %v50, %v35
  %v55 = vadd.f32 %v51, %v37
  %v56 = vadd.f32 %v52, %v39
  %v57 = vadd.f32 %v53, %v41
  %58 = vrot.lane.b32.xlu0 %v26, 125
  %v59 = vpop.permute.xlu0 %58
  %60 = vrot.lane.b32.xlu0 %v27, 125
  %v61 = vpop.permute.xlu0 %60
  %62 = vrot.lane.b32.xlu0 %v28, 125
  %v63 = vpop.permute.xlu0 %62
  %64 = vrot.lane.b32.xlu0 %v29, 125
  %v65 = vpop.permute.xlu0 %64
  %v70 = vadd.f32 %v54, %v59
  %v71 = vadd.f32 %v55, %v61
  %v72 = vadd.f32 %v56, %v63
  %v73 = vadd.f32 %v57, %v65
  %75 = vset.pattern.permute.xlu0 0
  %76 = vperm.xlu0 %75, %v46
  %v77 = vpop.permute.xlu0 %76
  %80 = vset.pattern.permute.xlu0 0
  %81 = vperm.xlu0 %80, %v47
  %v82 = vpop.permute.xlu0 %81
  %85 = vset.pattern.permute.xlu0 0
  %86 = vperm.xlu0 %85, %v48
  %v87 = vpop.permute.xlu0 %86
  %90 = vset.pattern.permute.xlu0 0
  %91 = vperm.xlu0 %90, %v49
  %v92 = vpop.permute.xlu0 %91
  %v94 = vmul.f32 %v77, %v18
  %v95 = vmul.f32 %v77, %v19
  %v96 = vmul.f32 %v82, %v18
  %v97 = vmul.f32 %v82, %v19
  %v98 = vmul.f32 %v87, %v18
  %v99 = vmul.f32 %v87, %v19
  %v100 = vmul.f32 %v92, %v18
  %v101 = vmul.f32 %v92, %v19
  %103 = vset.pattern.permute.xlu0 0
  %104 = vperm.xlu0 %103, %v70
  %v105 = vpop.permute.xlu0 %104
  %108 = vset.pattern.permute.xlu0 0
  %109 = vperm.xlu0 %108, %v71
  %v110 = vpop.permute.xlu0 %109
  %113 = vset.pattern.permute.xlu0 0
  %114 = vperm.xlu0 %113, %v72
  %v115 = vpop.permute.xlu0 %114
  %118 = vset.pattern.permute.xlu0 0
  %119 = vperm.xlu0 %118, %v73
  %v120 = vpop.permute.xlu0 %119
  %v122 = vadd.f32 %v105, %v94
  %v123 = vadd.f32 %v105, %v95
  %v124 = vadd.f32 %v110, %v96
  %v125 = vadd.f32 %v110, %v97
  %v126 = vadd.f32 %v115, %v98
  %v127 = vadd.f32 %v115, %v99
  %v128 = vadd.f32 %v120, %v100
  %v129 = vadd.f32 %v120, %v101
  %130 = vset.pattern.permute.xlu0 1
  %131 = vperm.xlu0 %130, %v46
  %v132 = vpop.permute.xlu0 %131
  %134 = vset.pattern.permute.xlu0 1
  %135 = vperm.xlu0 %134, %v47
  %v136 = vpop.permute.xlu0 %135
  %138 = vset.pattern.permute.xlu0 1
  %139 = vperm.xlu0 %138, %v48
  %v140 = vpop.permute.xlu0 %139
  %142 = vset.pattern.permute.xlu0 1
  %143 = vperm.xlu0 %142, %v49
  %v144 = vpop.permute.xlu0 %143
  %v146 = vmul.f32 %v132, %v24
  %v147 = vmul.f32 %v132, %v25
  %v148 = vmul.f32 %v136, %v24
  %v149 = vmul.f32 %v136, %v25
  %v150 = vmul.f32 %v140, %v24
  %v151 = vmul.f32 %v140, %v25
  %v152 = vmul.f32 %v144, %v24
  %v153 = vmul.f32 %v144, %v25
  %v154 = vadd.f32 %v122, %v146
  %v155 = vadd.f32 %v123, %v147
  %v156 = vadd.f32 %v124, %v148
  %v157 = vadd.f32 %v125, %v149
  %v158 = vadd.f32 %v126, %v150
  %v159 = vadd.f32 %v127, %v151
  %v160 = vadd.f32 %v128, %v152
  %v161 = vadd.f32 %v129, %v153
  %162 = vst [vmem:[%s2] sm:$0xff] %v154
  %163 = vst [vmem:[%s2 + $0x8] sm:$0xff] %v155
  %164 = vst [vmem:[%s2 + $0x10] sm:$0xff] %v156
  %165 = vst [vmem:[%s2 + $0x18] sm:$0xff] %v157
  %166 = vst [vmem:[%s2 + $0x20] sm:$0xff] %v158
  %167 = vst [vmem:[%s2 + $0x28] sm:$0xff] %v159
  %168 = vst [vmem:[%s2 + $0x30] sm:$0xff] %v160
  %169 = vst [vmem:[%s2 + $0x38] sm:$0xff] %v161
  // Predicated region
  $region10: #{soft_position_embed.1} parent=0 // pred_check
    _
  $region11: #{soft_position_embed.1} parent=0 // pred_check_branch
    %171 = sbr.rel (0) target = $region13
  $region12: #{soft_position_embed.1} parent=0 // pred_region
    _
  $region13: #{soft_position_embed.1} parent=0 // pred_fallthru
    _
  // Predicated region
  $region14: #{soft_position_embed.1} parent=0 // pred_check
    _
  $region15: #{soft_position_embed.1} parent=0 // pred_check_branch
    %173 = sbr.rel (0) target = $region17
  $region16: #{soft_position_embed.1} parent=0 // pred_region
    _
  $region17: #{soft_position_embed.1} parent=0 // pred_fallthru
    _

</llo_original>
